<compile_context>
chip_gen: v7x
topology: tpu7x:2x2x1
jax: 0.10.0
libtpu: 0.0.40
codegen_flags: <defaults>
</compile_context>

<pallas_src>
import functools

import jax
import jax.numpy as jnp
from jax.experimental import pallas as pl
from jax.experimental.pallas import tpu as pltpu


def _relu_kernel(x_ref, o_ref):
    # Pure VPU elementwise hot path over the whole VMEM tile.
    o_ref[...] = jnp.maximum(x_ref[...], jnp.zeros((), x_ref.dtype))


_LANE = 128
_SMALL_BYTES = 256 << 10            # below this, fused XLA op beats a kernel launch
_COL_CANDIDATES = (8192, 4096, 2048, 1024, 512, 256, 128)


@functools.lru_cache(maxsize=None)
def _vmem_capacity_bytes() -> int:
    """Best-effort VMEM capacity query; conservative (v7x-sized) fallback."""
    try:
        cap = getattr(pltpu.get_tpu_info(), "vmem_capacity_bytes", None)
        if cap:
            return int(cap)
    except Exception:
        pass
    return 64 << 20


@functools.lru_cache(maxsize=None)
def _tile_budget():
    """(target input bytes per grid step, vmem_limit_bytes), generation-aware."""
    vmem = _vmem_capacity_bytes()
    if vmem <= (64 << 20):
        # v7x: 64 MiB/TC physical. 10 MiB in-tile -> ~40 MiB double-buffered
        # in+out scratch, leaving ~16 MiB headroom for Mosaic internals.
        return 10 << 20, 48 << 20
    # v5e / v6e: 128 MiB physical VMEM -> go bigger to amortize step overhead.
    return 16 << 20, 72 << 20


def _round_up(x: int, m: int) -> int:
    return ((x + m - 1) // m) * m


def _relu_2d(x2d: jax.Array) -> jax.Array:
    """Run the ReLU kernel over a lane-dense 2D slab [rows, cols] (cols % 128 == 0)."""
    rows, cols = x2d.shape
    itemsize = jnp.dtype(x2d.dtype).itemsize
    sublane = max(8, 32 // itemsize)          # 8 for f32, 16 for bf16, 32 for int8/fp8
    target_tile_bytes, vmem_limit = _tile_budget()

    bytes_per_row = cols * itemsize
    max_tile_rows = max(
        sublane, (target_tile_bytes // max(bytes_per_row, 1)) // sublane * sublane
    )

    if rows >= 2 * sublane:
        # At least 2 (and an even number of) blocks so both v7x TCs get work,
        # with tile_rows derived from the block count -> balanced tail block.
        num_blocks = max(2, pl.cdiv(rows, max_tile_rows))
        if num_blocks % 2:
            num_blocks += 1
        tile_rows = _round_up(pl.cdiv(rows, num_blocks), sublane)
        block = (tile_rows, cols)
        grid = (pl.cdiv(rows, tile_rows),)    # partial last block is masked by Pallas
    else:
        # Too few rows to split: single block covering the whole slab
        # (block == full array dims is always legal).
        block = (rows, cols)
        grid = (1,)

    return pl.pallas_call(
        _relu_kernel,
        out_shape=jax.ShapeDtypeStruct((rows, cols), x2d.dtype),
        grid_spec=pltpu.PrefetchScalarGridSpec(
            num_scalar_prefetch=0,
            grid=grid,
            in_specs=[pl.BlockSpec(block, lambda i: (i, 0))],
            out_specs=pl.BlockSpec(block, lambda i: (i, 0)),
        ),
        compiler_params=pltpu.CompilerParams(
            dimension_semantics=("parallel",),
            vmem_limit_bytes=vmem_limit,
        ),
        cost_estimate=pl.CostEstimate(
            flops=rows * cols,
            transcendentals=0,
            bytes_accessed=2 * rows * cols * itemsize,
        ),
    )(x2d)


def complex_relu(x: jax.Array) -> jax.Array:
    """Pallas TPU implementation of ComplexReLU.forward (elementwise ReLU)."""
    n = x.size
    if n == 0:
        return x
    itemsize = jnp.dtype(x.dtype).itemsize

    # Small-input fast exit (kernel launch + DMA setup dominates below ~256 KiB)
    # and ragged element counts (n % 128 != 0): a plain XLA elementwise max is
    # already at the HBM roofline (1R + 1W) and avoids pad/slice extra passes.
    if n * itemsize < _SMALL_BYTES or n % _LANE != 0:
        return jnp.maximum(x, jnp.zeros((), x.dtype))

    # Fast path: metadata-only reshape to the widest lane-dense slab that divides n.
    cols = _LANE
    for c in _COL_CANDIDATES:
        if n % c == 0:
            cols = c
            break

    out2d = _relu_2d(x.reshape(n // cols, cols))
    return out2d.reshape(x.shape)


if __name__ == "__main__":
    key = jax.random.PRNGKey(0)
    k1, k2, k3 = jax.random.split(key, 3)

    # Module-consistent small NCHW input (takes the small-tensor fast exit).
    x_small = jax.random.normal(k1, (2, 4, 16, 16), dtype=jnp.float32)
    out_small = jax.block_until_ready(complex_relu(x_small))
    assert out_small.shape == x_small.shape and out_small.dtype == x_small.dtype
    assert jnp.allclose(out_small, jnp.maximum(x_small, 0.0)), "small-path mismatch"

    # Larger f32 input exercising the Pallas fast path (lane-dense reshape, 2 blocks).
    x_f32 = jax.random.normal(k2, (4, 8, 64, 128), dtype=jnp.float32)      # 1 MiB
    out_f32 = jax.block_until_ready(complex_relu(x_f32))
    assert out_f32.shape == x_f32.shape and out_f32.dtype == x_f32.dtype
    assert jnp.allclose(out_f32, jnp.maximum(x_f32, 0.0)), "f32 Pallas path mismatch"

    # Packed-dtype Pallas path (bf16, sublane multiple 16).
    x_bf16 = jax.random.normal(k3, (2, 8, 128, 256), dtype=jnp.bfloat16)   # 1 MiB
    out_bf16 = jax.block_until_ready(complex_relu(x_bf16))
    assert out_bf16.dtype == jnp.bfloat16
    assert jnp.allclose(
        out_bf16.astype(jnp.float32),
        jnp.maximum(x_bf16, 0).astype(jnp.float32),
    ), "bf16 Pallas path mismatch"

    # Ragged element count (n % 128 != 0) -> fused jnp fallback, still correct.
    x_rag = jax.random.normal(k1, (3, 5, 7), dtype=jnp.float32)
    out_rag = jax.block_until_ready(complex_relu(x_rag))
    assert out_rag.shape == x_rag.shape
    assert jnp.allclose(out_rag, jnp.maximum(x_rag, 0.0)), "ragged path mismatch"

    print("KERNEL_OK")
</pallas_src>

<mosaic_0001>
module attributes {stable_mosaic.version = 11 : i64} {
  func.func @_relu_kernel(%arg0: i32, %arg1: memref<16x8192xf32, #tpu.memory_space<vmem>>, %arg2: memref<16x8192xf32, #tpu.memory_space<vmem>>) attributes {dimension_semantics = [#tpu.dimension_semantics<parallel>], iteration_bounds = array<i64: 2>, scalar_prefetch = 0 : i64, scratch_operands = 0 : i64, tpu.core_type = #tpu.core_type<tc>, window_params = [{transform_indices = @transform_0, window_bounds = array<i64: 16, 8192>}, {transform_indices = @transform_1, window_bounds = array<i64: 16, 8192>}]} {
    %c0 = arith.constant 0 : index
    %c0_0 = arith.constant 0 : index
    %0 = vector.load %arg1[%c0, %c0_0] : memref<16x8192xf32, #tpu.memory_space<vmem>>, vector<16x8192xf32>
    %cst = arith.constant 0.000000e+00 : f32
    %1 = vector.broadcast %cst : f32 to vector<16x8192xf32>
    %2 = arith.maximumf %0, %1 : vector<16x8192xf32>
    %c0_1 = arith.constant 0 : index
    %c0_2 = arith.constant 0 : index
    %3 = vector.load %arg2[%c0_1, %c0_2] : memref<16x8192xf32, #tpu.memory_space<vmem>>, vector<16x8192xf32>
    tpu.vector_store %arg2[%c0_1, %c0_2], %2 {strides = array<i32>} : memref<16x8192xf32, #tpu.memory_space<vmem>>, vector<16x8192xf32>,
    return
  }
  func.func @transform_0(%arg0: i32) -> (i32, i32) {
    %c0_i32 = arith.constant 0 : i32
    %c0_i32_0 = arith.constant 0 : i32
    return %arg0, %c0_i32 : i32, i32
  }
  func.func @transform_1(%arg0: i32) -> (i32, i32) {
    %c0_i32 = arith.constant 0 : i32
    %c0_i32_0 = arith.constant 0 : i32
    return %arg0, %c0_i32 : i32, i32
  }
}

</mosaic_0001>

<llo_original>
// kernel: tpu_custom_call.1
$region0: #{tpu_custom_call.1}
  #allocation0 [shape = 'u32[]', space=smem, size = 0x4, offset = 0x4, fixed_abs, tag = 'smem constant byte address 0x4 - core index']
  #allocation1 [shape = 'u32[144,128]{1,0:T(1,128)}', space=vmem, size = 0x12000, scoped, tag = 'internal scratch']
  %s0 = inlined_call_operand.hbm [shape: f32[32,8192], index: 0, kind: input, shape index: {}]
  %s1 = inlined_call_operand.hbm [shape: f32[32,8192], index: 1, kind: output, shape index: {}]
  %s2 = sld [smem:[#allocation0]]
  $region41: #{tpu_custom_call.1} parent=0
    _
  %s4 = ssub.s32 1, %s2
  %s5 = scalar_select 0, %s4, %s2
  $region1: #{tpu_custom_call.1} parent=0
    #allocation2 [shape = 'u8[1048576]{0}', space=vmem, size = 0x100000, scoped, tag = 'input window, operand 0']
    #allocation3 [shape = 's32[2]{0}', space=sflag, size = 0x8, scoped, tag = 'scoped memory for tpu_custom_call.1']
    #allocation4 [shape = 's32[2]{0}', space=sflag, size = 0x8, scoped, tag = 'scoped memory for tpu_custom_call.1']
    #allocation5 [shape = 'u8[1048576]{0}', space=vmem, size = 0x100000, scoped, tag = 'output window, operand 0']
    %6 = vsyncpa [#allocation3], 0
    %s7 = scalar_lea.sflag [#allocation3], 1
    %8 = vsyncpa %s7, 0
    %9 = vsyncpa [#allocation4], 0
    %s10 = scalar_lea.sflag [#allocation4], 1
    %11 = vsyncpa %s10, 0
    loop: start=0, step=1, limit=4
    $region2: #{tpu_custom_call.1} parent=1 // loop_pre_header
      _
    $region3: #{tpu_custom_call.1} parent=1 // loop_header
      %s13 = sphi 0, %s17
      %p14 = scmp.ge.s32.totalorder %s13, 4
      %s23 = sphi 0, %s25
      %s26 = sphi 0, %s23
      %s27 = sphi 0, %s26
      %s43 = sphi 0, %s27
      %s49 = sphi 0, %s51
      %s52 = sphi 0, %s49
      %s53 = sphi 0, %s52
      %s69 = sphi 0, %s53
    $region4: #{tpu_custom_call.1} parent=1 // loop_header_branch
      %16 = sbr.rel (%p14) target = $region8
    $region5: #{tpu_custom_call.1} parent=1 // loop_body
      %s18 = ssub.s32 %s13, 1
      %s19 = ssub.s32 %s13, 2
      %s20 = sadd.s32 %s13, 1
      %s21 = ssub.s32 %s13, %s20
      %p22 = scmp.eq.s32.totalorder %s21, 0
      %s24 = sadd.s32 %s23, 1
      %s25 = scalar_select %p22, %s23, %s24
      %p28 = pneg %p22
      %p29 = scmp.eq.s32.totalorder %s13, 1
      %p30 = por %p28, %p29
      %p31 = scmp.ne.s32.totalorder %s23, %s26
      %p32 = scmp.eq.s32.totalorder %s13, 0
      %p33 = por %p31, %p32
      %p34 = scmp.ne.s32.totalorder %s23, %s26
      %p35 = scmp.eq.s32.totalorder %s18, 1
      %p36 = por %p34, %p35
      %p37 = scmp.ne.s32.totalorder %s26, %s27
      %p38 = scmp.eq.s32.totalorder %s18, 0
      %p39 = por %p37, %p38
      %p40 = scmp.ne.s32.totalorder %s26, %s27
      %p41 = scmp.eq.s32.totalorder %s19, 1
      %p42 = por %p40, %p41
      %p44 = scmp.ne.s32.totalorder %s27, %s43
      %p45 = scmp.eq.s32.totalorder %s19, 0
      %p46 = por %p44, %p45
      %s47 = ssub.s32 %s13, %s20
      %p48 = scmp.eq.s32.totalorder %s47, 0
      %s50 = sadd.s32 %s49, 1
      %s51 = scalar_select %p48, %s49, %s50
      %p54 = pneg %p48
      %p55 = scmp.eq.s32.totalorder %s13, 1
      %p56 = por %p54, %p55
      %p57 = scmp.ne.s32.totalorder %s49, %s52
      %p58 = scmp.eq.s32.totalorder %s13, 0
      %p59 = por %p57, %p58
      %p60 = scmp.ne.s32.totalorder %s49, %s52
      %p61 = scmp.eq.s32.totalorder %s18, 1
      %p62 = por %p60, %p61
      %p63 = scmp.ne.s32.totalorder %s52, %s53
      %p64 = scmp.eq.s32.totalorder %s18, 0
      %p65 = por %p63, %p64
      %p66 = scmp.ne.s32.totalorder %s52, %s53
      %p67 = scmp.eq.s32.totalorder %s19, 1
      %p68 = por %p66, %p67
      %p70 = scmp.ne.s32.totalorder %s53, %s69
      %p71 = scmp.eq.s32.totalorder %s19, 0
      %p72 = por %p70, %p71
      %p73 = scmp.le.s32.totalorder 1, %s13
      %p74 = scmp.lt.s32.totalorder %s13, 3
      %p75 = pnand %p73, %p74
      %p76 = pneg %p75
      // Predicated region
      $region9: #{tpu_custom_call.1} parent=5 // pred_check
        _
      $region10: #{tpu_custom_call.1} parent=5 // pred_check_branch
        %78 = sbr.rel (%p75) target = $region12
      $region11: #{tpu_custom_call.1} parent=5 // pred_region
        %s79 = ssub.s32 %s13, 1
      $region12: #{tpu_custom_call.1} parent=5 // pred_fallthru
        _
      %p80 = scmp.lt.s32.totalorder %s13, 2
      // Predicated region
      $region13: #{tpu_custom_call.1} parent=5 // pred_check
        %p81 = pneg %p80
      $region14: #{tpu_custom_call.1} parent=5 // pred_check_branch
        %83 = sbr.rel (%p81) target = $region16
      $region15: #{tpu_custom_call.1} parent=5 // pred_region
        // Predicated region
        $region17: #{tpu_custom_call.1} parent=15 // pred_check
          %p84 = pneg %p33
        $region18: #{tpu_custom_call.1} parent=15 // pred_check_branch
          %86 = sbr.rel (%p84) target = $region20
        $region19: #{tpu_custom_call.1} parent=15 // pred_region
          %s87 = sand.u32 %s23, 1
          %s88 = scalar_lea.sflag [#allocation3], %s87
          %s89 = sand.u32 %s23, 1
          %s90 = smul.addr %s89, 1024
          %s91 = scalar_lea.vmem [#allocation2], %s90
          %s92 = smul.u32 2, %s13
          %s94 = ssub.s32 16384, 16384
          %95 = vsyncadd %s88, %s94
          %s96 = smul.addr %s92, 64
          %s97 = smul.addr %s96, 128
          %s98 = scalar_lea.hbm %s0, %s97
          %s99 = sshll.u32 %s91, 4
          %s100 = int_to_ptr.vmem [resolvable:$true] %s99
          %105 = dma.hbm_to_vmem [thread:$0]  %s98, 16384, %s100, %s88, 8192, 8192, 512
        $region20: #{tpu_custom_call.1} parent=15 // pred_fallthru
          _
      $region16: #{tpu_custom_call.1} parent=5 // pred_fallthru
        _
      %p106 = scmp.le.s32.totalorder 1, %s13
      %p107 = scmp.lt.s32.totalorder %s13, 3
      %p108 = pnand %p106, %p107
      %p109 = pneg %p108
      // Predicated region
      $region21: #{tpu_custom_call.1} parent=5 // pred_check
        _
      $region22: #{tpu_custom_call.1} parent=5 // pred_check_branch
        %111 = sbr.rel (%p108) target = $region24
      $region23: #{tpu_custom_call.1} parent=5 // pred_region
        %s112 = ssub.s32 %s13, 1
        %s113 = sand.u32 %s26, 1
        %s114 = scalar_lea.sflag [#allocation3], %s113
        %s115 = sand.u32 %s26, 1
        %s116 = smul.addr %s115, 1024
        %s117 = scalar_lea.vmem [#allocation2], %s116
        // Predicated region
        $region25: #{tpu_custom_call.1} parent=23 // pred_check
          %p118 = pneg %p39
        $region26: #{tpu_custom_call.1} parent=23 // pred_check_branch
          %120 = sbr.rel (%p118) target = $region28
        $region27: #{tpu_custom_call.1} parent=23 // pred_region
          %121 = dma.done %s114, 16384
        $region28: #{tpu_custom_call.1} parent=23 // pred_fallthru
          _
        %s122 = sand.u32 %s26, 1
        %s123 = scalar_lea.sflag [#allocation3], %s122
        %s124 = sand.u32 %s26, 1
        %s125 = smul.addr %s124, 1024
        %s126 = scalar_lea.vmem [#allocation2], %s125
        %p127 = pneg %p39
        %p128 = pneg %p36
        %p129 = pneg %p65
        %p130 = pneg %p62
        %s131 = sand.u32 %s52, 1
        %s132 = scalar_lea.sflag [#allocation4], %s131
        %s133 = sand.u32 %s52, 1
        %s134 = smul.addr %s133, 1024
        %s135 = scalar_lea.vmem [#allocation5], %s134
        %s136 = smul.u32 2, %s18
        %s137 = smul.u32 2, %s18
        %v138 = vld [vmem:[%s117] sm:$0xff]
        %v139 = vld [vmem:[%s117 + $0x8] sm:$0xff]
        %v140 = vld [vmem:[%s117 + $0x10] sm:$0xff]
        %v141 = vld [vmem:[%s117 + $0x18] sm:$0xff]
        %v142 = vld [vmem:[%s117 + $0x20] sm:$0xff]
        %v143 = vld [vmem:[%s117 + $0x28] sm:$0xff]
        %v144 = vld [vmem:[%s117 + $0x30] sm:$0xff]
        %v145 = vld [vmem:[%s117 + $0x38] sm:$0xff]
        %v146 = vld [vmem:[%s117 + $0x40] sm:$0xff]
        %v147 = vld [vmem:[%s117 + $0x48] sm:$0xff]
        %v148 = vld [vmem:[%s117 + $0x50] sm:$0xff]
        %v149 = vld [vmem:[%s117 + $0x58] sm:$0xff]
        %v150 = vld [vmem:[%s117 + $0x60] sm:$0xff]
        %v151 = vld [vmem:[%s117 + $0x68] sm:$0xff]
        %v152 = vld [vmem:[%s117 + $0x70] sm:$0xff]
        %v153 = vld [vmem:[%s117 + $0x78] sm:$0xff]
        %v154 = vld [vmem:[%s117 + $0x80] sm:$0xff]
        %v155 = vld [vmem:[%s117 + $0x88] sm:$0xff]
        %v156 = vld [vmem:[%s117 + $0x90] sm:$0xff]
        %v157 = vld [vmem:[%s117 + $0x98] sm:$0xff]
        %v158 = vld [vmem:[%s117 + $0xa0] sm:$0xff]
        %v159 = vld [vmem:[%s117 + $0xa8] sm:$0xff]
        %v160 = vld [vmem:[%s117 + $0xb0] sm:$0xff]
        %v161 = vld [vmem:[%s117 + $0xb8] sm:$0xff]
        %v162 = vld [vmem:[%s117 + $0xc0] sm:$0xff]
        %v163 = vld [vmem:[%s117 + $0xc8] sm:$0xff]
        %v164 = vld [vmem:[%s117 + $0xd0] sm:$0xff]
        %v165 = vld [vmem:[%s117 + $0xd8] sm:$0xff]
        %v166 = vld [vmem:[%s117 + $0xe0] sm:$0xff]
        %v167 = vld [vmem:[%s117 + $0xe8] sm:$0xff]
        %v168 = vld [vmem:[%s117 + $0xf0] sm:$0xff]
        %v169 = vld [vmem:[%s117 + $0xf8] sm:$0xff]
        %v170 = vld [vmem:[%s117 + $0x100] sm:$0xff]
        %v171 = vld [vmem:[%s117 + $0x108] sm:$0xff]
        %v172 = vld [vmem:[%s117 + $0x110] sm:$0xff]
        %v173 = vld [vmem:[%s117 + $0x118] sm:$0xff]
        %v174 = vld [vmem:[%s117 + $0x120] sm:$0xff]
        %v175 = vld [vmem:[%s117 + $0x128] sm:$0xff]
        %v176 = vld [vmem:[%s117 + $0x130] sm:$0xff]
        %v177 = vld [vmem:[%s117 + $0x138] sm:$0xff]
        %v178 = vld [vmem:[%s117 + $0x140] sm:$0xff]
        %v179 = vld [vmem:[%s117 + $0x148] sm:$0xff]
        %v180 = vld [vmem:[%s117 + $0x150] sm:$0xff]
        %v181 = vld [vmem:[%s117 + $0x158] sm:$0xff]
        %v182 = vld [vmem:[%s117 + $0x160] sm:$0xff]
        %v183 = vld [vmem:[%s117 + $0x168] sm:$0xff]
        %v184 = vld [vmem:[%s117 + $0x170] sm:$0xff]
        %v185 = vld [vmem:[%s117 + $0x178] sm:$0xff]
        %v186 = vld [vmem:[%s117 + $0x180] sm:$0xff]
        %v187 = vld [vmem:[%s117 + $0x188] sm:$0xff]
        %v188 = vld [vmem:[%s117 + $0x190] sm:$0xff]
        %v189 = vld [vmem:[%s117 + $0x198] sm:$0xff]
        %v190 = vld [vmem:[%s117 + $0x1a0] sm:$0xff]
        %v191 = vld [vmem:[%s117 + $0x1a8] sm:$0xff]
        %v192 = vld [vmem:[%s117 + $0x1b0] sm:$0xff]
        %v193 = vld [vmem:[%s117 + $0x1b8] sm:$0xff]
        %v194 = vld [vmem:[%s117 + $0x1c0] sm:$0xff]
        %v195 = vld [vmem:[%s117 + $0x1c8] sm:$0xff]
        %v196 = vld [vmem:[%s117 + $0x1d0] sm:$0xff]
        %v197 = vld [vmem:[%s117 + $0x1d8] sm:$0xff]
        %v198 = vld [vmem:[%s117 + $0x1e0] sm:$0xff]
        %v199 = vld [vmem:[%s117 + $0x1e8] sm:$0xff]
        %v200 = vld [vmem:[%s117 + $0x1f0] sm:$0xff]
        %v201 = vld [vmem:[%s117 + $0x1f8] sm:$0xff]
        %v202 = vld [vmem:[%s117 + $0x200] sm:$0xff]
        %v203 = vld [vmem:[%s117 + $0x208] sm:$0xff]
        %v204 = vld [vmem:[%s117 + $0x210] sm:$0xff]
        %v205 = vld [vmem:[%s117 + $0x218] sm:$0xff]
        %v206 = vld [vmem:[%s117 + $0x220] sm:$0xff]
        %v207 = vld [vmem:[%s117 + $0x228] sm:$0xff]
        %v208 = vld [vmem:[%s117 + $0x230] sm:$0xff]
        %v209 = vld [vmem:[%s117 + $0x238] sm:$0xff]
        %v210 = vld [vmem:[%s117 + $0x240] sm:$0xff]
        %v211 = vld [vmem:[%s117 + $0x248] sm:$0xff]
        %v212 = vld [vmem:[%s117 + $0x250] sm:$0xff]
        %v213 = vld [vmem:[%s117 + $0x258] sm:$0xff]
        %v214 = vld [vmem:[%s117 + $0x260] sm:$0xff]
        %v215 = vld [vmem:[%s117 + $0x268] sm:$0xff]
        %v216 = vld [vmem:[%s117 + $0x270] sm:$0xff]
        %v217 = vld [vmem:[%s117 + $0x278] sm:$0xff]
        %v218 = vld [vmem:[%s117 + $0x280] sm:$0xff]
        %v219 = vld [vmem:[%s117 + $0x288] sm:$0xff]
        %v220 = vld [vmem:[%s117 + $0x290] sm:$0xff]
        %v221 = vld [vmem:[%s117 + $0x298] sm:$0xff]
        %v222 = vld [vmem:[%s117 + $0x2a0] sm:$0xff]
        %v223 = vld [vmem:[%s117 + $0x2a8] sm:$0xff]
        %v224 = vld [vmem:[%s117 + $0x2b0] sm:$0xff]
        %v225 = vld [vmem:[%s117 + $0x2b8] sm:$0xff]
        %v226 = vld [vmem:[%s117 + $0x2c0] sm:$0xff]
        %v227 = vld [vmem:[%s117 + $0x2c8] sm:$0xff]
        %v228 = vld [vmem:[%s117 + $0x2d0] sm:$0xff]
        %v229 = vld [vmem:[%s117 + $0x2d8] sm:$0xff]
        %v230 = vld [vmem:[%s117 + $0x2e0] sm:$0xff]
        %v231 = vld [vmem:[%s117 + $0x2e8] sm:$0xff]
        %v232 = vld [vmem:[%s117 + $0x2f0] sm:$0xff]
        %v233 = vld [vmem:[%s117 + $0x2f8] sm:$0xff]
        %v234 = vld [vmem:[%s117 + $0x300] sm:$0xff]
        %v235 = vld [vmem:[%s117 + $0x308] sm:$0xff]
        %v236 = vld [vmem:[%s117 + $0x310] sm:$0xff]
        %v237 = vld [vmem:[%s117 + $0x318] sm:$0xff]
        %v238 = vld [vmem:[%s117 + $0x320] sm:$0xff]
        %v239 = vld [vmem:[%s117 + $0x328] sm:$0xff]
        %v240 = vld [vmem:[%s117 + $0x330] sm:$0xff]
        %v241 = vld [vmem:[%s117 + $0x338] sm:$0xff]
        %v242 = vld [vmem:[%s117 + $0x340] sm:$0xff]
        %v243 = vld [vmem:[%s117 + $0x348] sm:$0xff]
        %v244 = vld [vmem:[%s117 + $0x350] sm:$0xff]
        %v245 = vld [vmem:[%s117 + $0x358] sm:$0xff]
        %v246 = vld [vmem:[%s117 + $0x360] sm:$0xff]
        %v247 = vld [vmem:[%s117 + $0x368] sm:$0xff]
        %v248 = vld [vmem:[%s117 + $0x370] sm:$0xff]
        %v249 = vld [vmem:[%s117 + $0x378] sm:$0xff]
        %v250 = vld [vmem:[%s117 + $0x380] sm:$0xff]
        %v251 = vld [vmem:[%s117 + $0x388] sm:$0xff]
        %v252 = vld [vmem:[%s117 + $0x390] sm:$0xff]
        %v253 = vld [vmem:[%s117 + $0x398] sm:$0xff]
        %v254 = vld [vmem:[%s117 + $0x3a0] sm:$0xff]
        %v255 = vld [vmem:[%s117 + $0x3a8] sm:$0xff]
        %v256 = vld [vmem:[%s117 + $0x3b0] sm:$0xff]
        %v257 = vld [vmem:[%s117 + $0x3b8] sm:$0xff]
        %v258 = vld [vmem:[%s117 + $0x3c0] sm:$0xff]
        %v259 = vld [vmem:[%s117 + $0x3c8] sm:$0xff]
        %v260 = vld [vmem:[%s117 + $0x3d0] sm:$0xff]
        %v261 = vld [vmem:[%s117 + $0x3d8] sm:$0xff]
        %v262 = vld [vmem:[%s117 + $0x3e0] sm:$0xff]
        %v263 = vld [vmem:[%s117 + $0x3e8] sm:$0xff]
        %v264 = vld [vmem:[%s117 + $0x3f0] sm:$0xff]
        %v265 = vld [vmem:[%s117 + $0x3f8] sm:$0xff]
        %v266 = vmax.f32 %v138, 0.0
        %v267 = vmax.f32 %v139, 0.0
        %v268 = vmax.f32 %v140, 0.0
        %v269 = vmax.f32 %v141, 0.0
        %v270 = vmax.f32 %v142, 0.0
        %v271 = vmax.f32 %v143, 0.0
        %v272 = vmax.f32 %v144, 0.0
        %v273 = vmax.f32 %v145, 0.0
        %v274 = vmax.f32 %v146, 0.0
        %v275 = vmax.f32 %v147, 0.0
        %v276 = vmax.f32 %v148, 0.0
        %v277 = vmax.f32 %v149, 0.0
        %v278 = vmax.f32 %v150, 0.0
        %v279 = vmax.f32 %v151, 0.0
        %v280 = vmax.f32 %v152, 0.0
        %v281 = vmax.f32 %v153, 0.0
        %v282 = vmax.f32 %v154, 0.0
        %v283 = vmax.f32 %v155, 0.0
        %v284 = vmax.f32 %v156, 0.0
        %v285 = vmax.f32 %v157, 0.0
        %v286 = vmax.f32 %v158, 0.0
        %v287 = vmax.f32 %v159, 0.0
        %v288 = vmax.f32 %v160, 0.0
        %v289 = vmax.f32 %v161, 0.0
        %v290 = vmax.f32 %v162, 0.0
        %v291 = vmax.f32 %v163, 0.0
        %v292 = vmax.f32 %v164, 0.0
        %v293 = vmax.f32 %v165, 0.0
        %v294 = vmax.f32 %v166, 0.0
        %v295 = vmax.f32 %v167, 0.0
        %v296 = vmax.f32 %v168, 0.0
        %v297 = vmax.f32 %v169, 0.0
        %v298 = vmax.f32 %v170, 0.0
        %v299 = vmax.f32 %v171, 0.0
        %v300 = vmax.f32 %v172, 0.0
        %v301 = vmax.f32 %v173, 0.0
        %v302 = vmax.f32 %v174, 0.0
        %v303 = vmax.f32 %v175, 0.0
        %v304 = vmax.f32 %v176, 0.0
        %v305 = vmax.f32 %v177, 0.0
        %v306 = vmax.f32 %v178, 0.0
        %v307 = vmax.f32 %v179, 0.0
        %v308 = vmax.f32 %v180, 0.0
        %v309 = vmax.f32 %v181, 0.0
        %v310 = vmax.f32 %v182, 0.0
        %v311 = vmax.f32 %v183, 0.0
        %v312 = vmax.f32 %v184, 0.0
        %v313 = vmax.f32 %v185, 0.0
        %v314 = vmax.f32 %v186, 0.0
        %v315 = vmax.f32 %v187, 0.0
        %v316 = vmax.f32 %v188, 0.0
        %v317 = vmax.f32 %v189, 0.0
        %v318 = vmax.f32 %v190, 0.0
        %v319 = vmax.f32 %v191, 0.0
        %v320 = vmax.f32 %v192, 0.0
        %v321 = vmax.f32 %v193, 0.0
        %v322 = vmax.f32 %v194, 0.0
        %v323 = vmax.f32 %v195, 0.0
        %v324 = vmax.f32 %v196, 0.0
        %v325 = vmax.f32 %v197, 0.0
        %v326 = vmax.f32 %v198, 0.0
        %v327 = vmax.f32 %v199, 0.0
        %v328 = vmax.f32 %v200, 0.0
        %v329 = vmax.f32 %v201, 0.0
        %v330 = vmax.f32 %v202, 0.0
        %v331 = vmax.f32 %v203, 0.0
        %v332 = vmax.f32 %v204, 0.0
        %v333 = vmax.f32 %v205, 0.0
        %v334 = vmax.f32 %v206, 0.0
        %v335 = vmax.f32 %v207, 0.0
        %v336 = vmax.f32 %v208, 0.0
        %v337 = vmax.f32 %v209, 0.0
        %v338 = vmax.f32 %v210, 0.0
        %v339 = vmax.f32 %v211, 0.0
        %v340 = vmax.f32 %v212, 0.0
        %v341 = vmax.f32 %v213, 0.0
        %v342 = vmax.f32 %v214, 0.0
        %v343 = vmax.f32 %v215, 0.0
        %v344 = vmax.f32 %v216, 0.0
        %v345 = vmax.f32 %v217, 0.0
        %v346 = vmax.f32 %v218, 0.0
        %v347 = vmax.f32 %v219, 0.0
        %v348 = vmax.f32 %v220, 0.0
        %v349 = vmax.f32 %v221, 0.0
        %v350 = vmax.f32 %v222, 0.0
        %v351 = vmax.f32 %v223, 0.0
        %v352 = vmax.f32 %v224, 0.0
        %v353 = vmax.f32 %v225, 0.0
        %v354 = vmax.f32 %v226, 0.0
        %v355 = vmax.f32 %v227, 0.0
        %v356 = vmax.f32 %v228, 0.0
        %v357 = vmax.f32 %v229, 0.0
        %v358 = vmax.f32 %v230, 0.0
        %v359 = vmax.f32 %v231, 0.0
        %v360 = vmax.f32 %v232, 0.0
        %v361 = vmax.f32 %v233, 0.0
        %v362 = vmax.f32 %v234, 0.0
        %v363 = vmax.f32 %v235, 0.0
        %v364 = vmax.f32 %v236, 0.0
        %v365 = vmax.f32 %v237, 0.0
        %v366 = vmax.f32 %v238, 0.0
        %v367 = vmax.f32 %v239, 0.0
        %v368 = vmax.f32 %v240, 0.0
        %v369 = vmax.f32 %v241, 0.0
        %v370 = vmax.f32 %v242, 0.0
        %v371 = vmax.f32 %v243, 0.0
        %v372 = vmax.f32 %v244, 0.0
        %v373 = vmax.f32 %v245, 0.0
        %v374 = vmax.f32 %v246, 0.0
        %v375 = vmax.f32 %v247, 0.0
        %v376 = vmax.f32 %v248, 0.0
        %v377 = vmax.f32 %v249, 0.0
        %v378 = vmax.f32 %v250, 0.0
        %v379 = vmax.f32 %v251, 0.0
        %v380 = vmax.f32 %v252, 0.0
        %v381 = vmax.f32 %v253, 0.0
        %v382 = vmax.f32 %v254, 0.0
        %v383 = vmax.f32 %v255, 0.0
        %v384 = vmax.f32 %v256, 0.0
        %v385 = vmax.f32 %v257, 0.0
        %v386 = vmax.f32 %v258, 0.0
        %v387 = vmax.f32 %v259, 0.0
        %v388 = vmax.f32 %v260, 0.0
        %v389 = vmax.f32 %v261, 0.0
        %v390 = vmax.f32 %v262, 0.0
        %v391 = vmax.f32 %v263, 0.0
        %v392 = vmax.f32 %v264, 0.0
        %v393 = vmax.f32 %v265, 0.0
        %394 = vst [vmem:[%s135] sm:$0xff] %v266
        %395 = vst [vmem:[%s135 + $0x8] sm:$0xff] %v267
        %396 = vst [vmem:[%s135 + $0x10] sm:$0xff] %v268
        %397 = vst [vmem:[%s135 + $0x18] sm:$0xff] %v269
        %398 = vst [vmem:[%s135 + $0x20] sm:$0xff] %v270
        %399 = vst [vmem:[%s135 + $0x28] sm:$0xff] %v271
        %400 = vst [vmem:[%s135 + $0x30] sm:$0xff] %v272
        %401 = vst [vmem:[%s135 + $0x38] sm:$0xff] %v273
        %402 = vst [vmem:[%s135 + $0x40] sm:$0xff] %v274
        %403 = vst [vmem:[%s135 + $0x48] sm:$0xff] %v275
        %404 = vst [vmem:[%s135 + $0x50] sm:$0xff] %v276
        %405 = vst [vmem:[%s135 + $0x58] sm:$0xff] %v277
        %406 = vst [vmem:[%s135 + $0x60] sm:$0xff] %v278
        %407 = vst [vmem:[%s135 + $0x68] sm:$0xff] %v279
        %408 = vst [vmem:[%s135 + $0x70] sm:$0xff] %v280
        %409 = vst [vmem:[%s135 + $0x78] sm:$0xff] %v281
        %410 = vst [vmem:[%s135 + $0x80] sm:$0xff] %v282
        %411 = vst [vmem:[%s135 + $0x88] sm:$0xff] %v283
        %412 = vst [vmem:[%s135 + $0x90] sm:$0xff] %v284
        %413 = vst [vmem:[%s135 + $0x98] sm:$0xff] %v285
        %414 = vst [vmem:[%s135 + $0xa0] sm:$0xff] %v286
        %415 = vst [vmem:[%s135 + $0xa8] sm:$0xff] %v287
        %416 = vst [vmem:[%s135 + $0xb0] sm:$0xff] %v288
        %417 = vst [vmem:[%s135 + $0xb8] sm:$0xff] %v289
        %418 = vst [vmem:[%s135 + $0xc0] sm:$0xff] %v290
        %419 = vst [vmem:[%s135 + $0xc8] sm:$0xff] %v291
        %420 = vst [vmem:[%s135 + $0xd0] sm:$0xff] %v292
        %421 = vst [vmem:[%s135 + $0xd8] sm:$0xff] %v293
        %422 = vst [vmem:[%s135 + $0xe0] sm:$0xff] %v294
        %423 = vst [vmem:[%s135 + $0xe8] sm:$0xff] %v295
        %424 = vst [vmem:[%s135 + $0xf0] sm:$0xff] %v296
        %425 = vst [vmem:[%s135 + $0xf8] sm:$0xff] %v297
        %426 = vst [vmem:[%s135 + $0x100] sm:$0xff] %v298
        %427 = vst [vmem:[%s135 + $0x108] sm:$0xff] %v299
        %428 = vst [vmem:[%s135 + $0x110] sm:$0xff] %v300
        %429 = vst [vmem:[%s135 + $0x118] sm:$0xff] %v301
        %430 = vst [vmem:[%s135 + $0x120] sm:$0xff] %v302
        %431 = vst [vmem:[%s135 + $0x128] sm:$0xff] %v303
        %432 = vst [vmem:[%s135 + $0x130] sm:$0xff] %v304
        %433 = vst [vmem:[%s135 + $0x138] sm:$0xff] %v305
        %434 = vst [vmem:[%s135 + $0x140] sm:$0xff] %v306
        %435 = vst [vmem:[%s135 + $0x148] sm:$0xff] %v307
        %436 = vst [vmem:[%s135 + $0x150] sm:$0xff] %v308
        %437 = vst [vmem:[%s135 + $0x158] sm:$0xff] %v309
        %438 = vst [vmem:[%s135 + $0x160] sm:$0xff] %v310
        %439 = vst [vmem:[%s135 + $0x168] sm:$0xff] %v311
        %440 = vst [vmem:[%s135 + $0x170] sm:$0xff] %v312
        %441 = vst [vmem:[%s135 + $0x178] sm:$0xff] %v313
        %442 = vst [vmem:[%s135 + $0x180] sm:$0xff] %v314
        %443 = vst [vmem:[%s135 + $0x188] sm:$0xff] %v315
        %444 = vst [vmem:[%s135 + $0x190] sm:$0xff] %v316
        %445 = vst [vmem:[%s135 + $0x198] sm:$0xff] %v317
        %446 = vst [vmem:[%s135 + $0x1a0] sm:$0xff] %v318
        %447 = vst [vmem:[%s135 + $0x1a8] sm:$0xff] %v319
        %448 = vst [vmem:[%s135 + $0x1b0] sm:$0xff] %v320
        %449 = vst [vmem:[%s135 + $0x1b8] sm:$0xff] %v321
        %450 = vst [vmem:[%s135 + $0x1c0] sm:$0xff] %v322
        %451 = vst [vmem:[%s135 + $0x1c8] sm:$0xff] %v323
        %452 = vst [vmem:[%s135 + $0x1d0] sm:$0xff] %v324
        %453 = vst [vmem:[%s135 + $0x1d8] sm:$0xff] %v325
        %454 = vst [vmem:[%s135 + $0x1e0] sm:$0xff] %v326
        %455 = vst [vmem:[%s135 + $0x1e8] sm:$0xff] %v327
        %456 = vst [vmem:[%s135 + $0x1f0] sm:$0xff] %v328
        %457 = vst [vmem:[%s135 + $0x1f8] sm:$0xff] %v329
        %458 = vst [vmem:[%s135 + $0x200] sm:$0xff] %v330
        %459 = vst [vmem:[%s135 + $0x208] sm:$0xff] %v331
        %460 = vst [vmem:[%s135 + $0x210] sm:$0xff] %v332
        %461 = vst [vmem:[%s135 + $0x218] sm:$0xff] %v333
        %462 = vst [vmem:[%s135 + $0x220] sm:$0xff] %v334
        %463 = vst [vmem:[%s135 + $0x228] sm:$0xff] %v335
        %464 = vst [vmem:[%s135 + $0x230] sm:$0xff] %v336
        %465 = vst [vmem:[%s135 + $0x238] sm:$0xff] %v337
        %466 = vst [vmem:[%s135 + $0x240] sm:$0xff] %v338
        %467 = vst [vmem:[%s135 + $0x248] sm:$0xff] %v339
        %468 = vst [vmem:[%s135 + $0x250] sm:$0xff] %v340
        %469 = vst [vmem:[%s135 + $0x258] sm:$0xff] %v341
        %470 = vst [vmem:[%s135 + $0x260] sm:$0xff] %v342
        %471 = vst [vmem:[%s135 + $0x268] sm:$0xff] %v343
        %472 = vst [vmem:[%s135 + $0x270] sm:$0xff] %v344
        %473 = vst [vmem:[%s135 + $0x278] sm:$0xff] %v345
        %474 = vst [vmem:[%s135 + $0x280] sm:$0xff] %v346
        %475 = vst [vmem:[%s135 + $0x288] sm:$0xff] %v347
        %476 = vst [vmem:[%s135 + $0x290] sm:$0xff] %v348
        %477 = vst [vmem:[%s135 + $0x298] sm:$0xff] %v349
        %478 = vst [vmem:[%s135 + $0x2a0] sm:$0xff] %v350
        %479 = vst [vmem:[%s135 + $0x2a8] sm:$0xff] %v351
        %480 = vst [vmem:[%s135 + $0x2b0] sm:$0xff] %v352
        %481 = vst [vmem:[%s135 + $0x2b8] sm:$0xff] %v353
        %482 = vst [vmem:[%s135 + $0x2c0] sm:$0xff] %v354
        %483 = vst [vmem:[%s135 + $0x2c8] sm:$0xff] %v355
        %484 = vst [vmem:[%s135 + $0x2d0] sm:$0xff] %v356
        %485 = vst [vmem:[%s135 + $0x2d8] sm:$0xff] %v357
        %486 = vst [vmem:[%s135 + $0x2e0] sm:$0xff] %v358
        %487 = vst [vmem:[%s135 + $0x2e8] sm:$0xff] %v359
        %488 = vst [vmem:[%s135 + $0x2f0] sm:$0xff] %v360
        %489 = vst [vmem:[%s135 + $0x2f8] sm:$0xff] %v361
        %490 = vst [vmem:[%s135 + $0x300] sm:$0xff] %v362
        %491 = vst [vmem:[%s135 + $0x308] sm:$0xff] %v363
        %492 = vst [vmem:[%s135 + $0x310] sm:$0xff] %v364
        %493 = vst [vmem:[%s135 + $0x318] sm:$0xff] %v365
        %494 = vst [vmem:[%s135 + $0x320] sm:$0xff] %v366
        %495 = vst [vmem:[%s135 + $0x328] sm:$0xff] %v367
        %496 = vst [vmem:[%s135 + $0x330] sm:$0xff] %v368
        %497 = vst [vmem:[%s135 + $0x338] sm:$0xff] %v369
        %498 = vst [vmem:[%s135 + $0x340] sm:$0xff] %v370
        %499 = vst [vmem:[%s135 + $0x348] sm:$0xff] %v371
        %500 = vst [vmem:[%s135 + $0x350] sm:$0xff] %v372
        %501 = vst [vmem:[%s135 + $0x358] sm:$0xff] %v373
        %502 = vst [vmem:[%s135 + $0x360] sm:$0xff] %v374
        %503 = vst [vmem:[%s135 + $0x368] sm:$0xff] %v375
        %504 = vst [vmem:[%s135 + $0x370] sm:$0xff] %v376
        %505 = vst [vmem:[%s135 + $0x378] sm:$0xff] %v377
        %506 = vst [vmem:[%s135 + $0x380] sm:$0xff] %v378
        %507 = vst [vmem:[%s135 + $0x388] sm:$0xff] %v379
        %508 = vst [vmem:[%s135 + $0x390] sm:$0xff] %v380
        %509 = vst [vmem:[%s135 + $0x398] sm:$0xff] %v381
        %510 = vst [vmem:[%s135 + $0x3a0] sm:$0xff] %v382
        %511 = vst [vmem:[%s135 + $0x3a8] sm:$0xff] %v383
        %512 = vst [vmem:[%s135 + $0x3b0] sm:$0xff] %v384
        %513 = vst [vmem:[%s135 + $0x3b8] sm:$0xff] %v385
        %514 = vst [vmem:[%s135 + $0x3c0] sm:$0xff] %v386
        %515 = vst [vmem:[%s135 + $0x3c8] sm:$0xff] %v387
        %516 = vst [vmem:[%s135 + $0x3d0] sm:$0xff] %v388
        %517 = vst [vmem:[%s135 + $0x3d8] sm:$0xff] %v389
        %518 = vst [vmem:[%s135 + $0x3e0] sm:$0xff] %v390
        %519 = vst [vmem:[%s135 + $0x3e8] sm:$0xff] %v391
        %520 = vst [vmem:[%s135 + $0x3f0] sm:$0xff] %v392
        %521 = vst [vmem:[%s135 + $0x3f8] sm:$0xff] %v393
        %s522 = sand.u32 %s52, 1
        %s523 = scalar_lea.sflag [#allocation4], %s522
        %s524 = sand.u32 %s52, 1
        %s525 = smul.addr %s524, 1024
        %s526 = scalar_lea.vmem [#allocation5], %s525
        // Predicated region
        $region29: #{tpu_custom_call.1} parent=23 // pred_check
          %p527 = pneg %p62
        $region30: #{tpu_custom_call.1} parent=23 // pred_check_branch
          %529 = sbr.rel (%p527) target = $region32
        $region31: #{tpu_custom_call.1} parent=23 // pred_region
          %s530 = smul.u32 2, %s18
          %s532 = ssub.s32 16384, 16384
          %533 = vsyncadd %s523, %s532
          %s534 = smul.addr %s530, 64
          %s535 = smul.addr %s534, 128
          %s536 = scalar_lea.hbm %s1, %s535
          %s537 = sshll.u32 %s526, 4
          %s538 = int_to_ptr.vmem [resolvable:$true] %s537
          %543 = dma.vmem_to_hbm [thread:$0]  %s538, 16384, %s536, %s523, 8192, 8192, 512
        $region32: #{tpu_custom_call.1} parent=23 // pred_fallthru
          _
      $region24: #{tpu_custom_call.1} parent=5 // pred_fallthru
        _
      %p544 = scmp.le.s32.totalorder 2, %s13
      // Predicated region
      $region33: #{tpu_custom_call.1} parent=5 // pred_check
        %p545 = pneg %p544
      $region34: #{tpu_custom_call.1} parent=5 // pred_check_branch
        %547 = sbr.rel (%p545) target = $region36
      $region35: #{tpu_custom_call.1} parent=5 // pred_region
        %s548 = ssub.s32 %s13, 2
        // Predicated region
        $region37: #{tpu_custom_call.1} parent=35 // pred_check
          %p549 = pneg %p68
        $region38: #{tpu_custom_call.1} parent=35 // pred_check_branch
          %551 = sbr.rel (%p549) target = $region40
        $region39: #{tpu_custom_call.1} parent=35 // pred_region
          %s552 = sand.u32 %s53, 1
          %s553 = scalar_lea.sflag [#allocation4], %s552
          %s554 = sand.u32 %s53, 1
          %s555 = smul.addr %s554, 1024
          %s556 = scalar_lea.vmem [#allocation5], %s555
          %557 = dma.done %s553, 16384
        $region40: #{tpu_custom_call.1} parent=35 // pred_fallthru
          _
      $region36: #{tpu_custom_call.1} parent=5 // pred_fallthru
        _
    $region6: #{tpu_custom_call.1} parent=1 // loop_footer
      %s17 = sadd.s32 1, %s13
    $region7: #{tpu_custom_call.1} parent=1 // loop_footer_branch
      %12 = sbr.rel target = $region3
    $region8: #{tpu_custom_call.1} parent=1 // loop_exit
      _
    %558 = vsyncpa [#allocation3], 1
    %s559 = scalar_lea.sflag [#allocation3], 1
    %560 = vsyncpa %s559, 1
    %561 = vsyncpa [#allocation4], 1
    %s562 = scalar_lea.sflag [#allocation4], 1
    %563 = vsyncpa %s562, 1

</llo_original>
